<compile_context>
chip_gen: v7x
topology: tpu7x:2x2x1
jax: 0.10.0
libtpu: 0.0.40
codegen_flags: <defaults>
</compile_context>

<pallas_src>
import numpy as np
import jax
import jax.numpy as jnp
from jax.experimental import pallas as pl
from jax.experimental.pallas import tpu as pltpu


_SHIFT = (-0.030, -0.088, -0.188)
_SCALE = (0.458, 0.448, 0.450)


def _round_up(x, m):
    return (x + m - 1) // m * m


# -----------------------------------------------------------------------------
# Pallas kernel: one (tr, tl) tile of  (x - shift) / scale
#   x_ref     : (tr, tl)  f32
#   shift_ref : (tr, 1)   f32   per-row shift, broadcast across lanes
#   scale_ref : (tr, 1)   f32   per-row scale, broadcast across lanes
# -----------------------------------------------------------------------------
def _scaling_kernel(x_ref, shift_ref, scale_ref, o_ref):
    o_ref[...] = (x_ref[...] - shift_ref[...]) / scale_ref[...]


def scaling_layer(x, shift=None, scale=None, *, tr_max=256, tl_max=1024):
    """ScalingLayer.forward for NCHW input (N, C, H, W) -> (N, C, H, W)."""
    if shift is None:
        shift = jnp.asarray(_SHIFT, jnp.float32)
    if scale is None:
        scale = jnp.asarray(_SCALE, jnp.float32)

    N, C, H, W = x.shape
    R, L = N * C, H * W
    x2 = x.reshape(R, L).astype(jnp.float32)

    # Per-row (i.e. per (n, c)) shift / scale columns.
    shift_col = jnp.tile(shift.reshape(C, 1), (N, 1))          # (R, 1)
    scale_col = jnp.tile(scale.reshape(C, 1), (N, 1))          # (R, 1)

    # Lane-dense tiling: rows padded to a multiple of 8, lanes to 128.
    tr = min(tr_max, _round_up(R, 8))
    tl = min(tl_max, _round_up(L, 128))
    Rp, Lp = _round_up(R, tr), _round_up(L, tl)
    if (Rp, Lp) != (R, L):
        x2 = jnp.pad(x2, ((0, Rp - R), (0, Lp - L)))
        shift_col = jnp.pad(shift_col, ((0, Rp - R), (0, 0)))
        scale_col = jnp.pad(scale_col, ((0, Rp - R), (0, 0)),
                            constant_values=1.0)               # no 0-div in pad rows

    out = pl.pallas_call(
        _scaling_kernel,
        out_shape=jax.ShapeDtypeStruct((Rp, Lp), jnp.float32),
        grid=(Rp // tr, Lp // tl),
        in_specs=[
            pl.BlockSpec((tr, tl), lambda i, j: (i, j)),
            pl.BlockSpec((tr, 1), lambda i, j: (i, 0)),
            pl.BlockSpec((tr, 1), lambda i, j: (i, 0)),
        ],
        out_specs=pl.BlockSpec((tr, tl), lambda i, j: (i, j)),
        compiler_params=pltpu.CompilerParams(
            dimension_semantics=("parallel", "parallel"),
            vmem_limit_bytes=32 * 1024 * 1024),
    )(x2, shift_col, scale_col)

    return out[:R, :L].reshape(N, C, H, W)


# -----------------------------------------------------------------------------
if __name__ == "__main__":
    key = jax.random.PRNGKey(0)
    # Small shapes consistent with the module: batch=2, 3 channels, 16x16.
    x = jax.random.normal(key, (2, 3, 16, 16), jnp.float32)

    out = jax.block_until_ready(jax.jit(scaling_layer)(x))

    # Pure-JAX reference (identical formula to the PyTorch module).
    shift = jnp.asarray(_SHIFT, jnp.float32)[None, :, None, None]
    scale = jnp.asarray(_SCALE, jnp.float32)[None, :, None, None]
    ref = (x - shift) / scale

    assert out.shape == x.shape, out.shape
    np.testing.assert_allclose(np.asarray(out), np.asarray(ref),
                               rtol=1e-6, atol=1e-7)
    print("KERNEL_OK")
</pallas_src>

<mosaic_0001>
module attributes {stable_mosaic.version = 11 : i64} {
  func.func @_scaling_kernel(%arg0: i32, %arg1: i32, %arg2: memref<8x256xf32, #tpu.memory_space<vmem>>, %arg3: memref<8x1xf32, #tpu.memory_space<vmem>>, %arg4: memref<8x1xf32, #tpu.memory_space<vmem>>, %arg5: memref<8x256xf32, #tpu.memory_space<vmem>>) attributes {dimension_semantics = [#tpu.dimension_semantics<parallel>, #tpu.dimension_semantics<parallel>], iteration_bounds = array<i64: 1, 1>, scalar_prefetch = 0 : i64, scratch_operands = 0 : i64, tpu.core_type = #tpu.core_type<tc>, window_params = [{transform_indices = @transform_0, window_bounds = array<i64: 8, 256>}, {transform_indices = @transform_1, window_bounds = array<i64: 8, 1>}, {transform_indices = @transform_2, window_bounds = array<i64: 8, 1>}, {transform_indices = @transform_3, window_bounds = array<i64: 8, 256>}]} {
    %c0 = arith.constant 0 : index
    %c0_0 = arith.constant 0 : index
    %0 = vector.load %arg2[%c0, %c0_0] : memref<8x256xf32, #tpu.memory_space<vmem>>, vector<8x256xf32>
    %c0_1 = arith.constant 0 : index
    %c0_2 = arith.constant 0 : index
    %1 = vector.load %arg3[%c0_1, %c0_2] : memref<8x1xf32, #tpu.memory_space<vmem>>, vector<8x1xf32>
    %2 = vector.broadcast %1 : vector<8x1xf32> to vector<8x256xf32>
    %3 = arith.subf %0, %2 : vector<8x256xf32>
    %c0_3 = arith.constant 0 : index
    %c0_4 = arith.constant 0 : index
    %4 = vector.load %arg4[%c0_3, %c0_4] : memref<8x1xf32, #tpu.memory_space<vmem>>, vector<8x1xf32>
    %5 = vector.broadcast %4 : vector<8x1xf32> to vector<8x256xf32>
    %6 = arith.divf %3, %5 : vector<8x256xf32>
    %c0_5 = arith.constant 0 : index
    %c0_6 = arith.constant 0 : index
    %7 = vector.load %arg5[%c0_5, %c0_6] : memref<8x256xf32, #tpu.memory_space<vmem>>, vector<8x256xf32>
    tpu.vector_store %arg5[%c0_5, %c0_6], %6 {strides = array<i32>} : memref<8x256xf32, #tpu.memory_space<vmem>>, vector<8x256xf32>,
    return
  }
  func.func @transform_0(%arg0: i32, %arg1: i32) -> (i32, i32) {
    %c0_i32 = arith.constant 0 : i32
    return %arg0, %arg1 : i32, i32
  }
  func.func @transform_1(%arg0: i32, %arg1: i32) -> (i32, i32) {
    %c0_i32 = arith.constant 0 : i32
    %c0_i32_0 = arith.constant 0 : i32
    return %arg0, %c0_i32 : i32, i32
  }
  func.func @transform_2(%arg0: i32, %arg1: i32) -> (i32, i32) {
    %c0_i32 = arith.constant 0 : i32
    %c0_i32_0 = arith.constant 0 : i32
    return %arg0, %c0_i32 : i32, i32
  }
  func.func @transform_3(%arg0: i32, %arg1: i32) -> (i32, i32) {
    %c0_i32 = arith.constant 0 : i32
    return %arg0, %arg1 : i32, i32
  }
}

</mosaic_0001>

<llo_original>
// kernel: scaling_layer.1
$region0: #{scaling_layer.1}
  #allocation0 [shape = 'u32[]', space=smem, size = 0x4, offset = 0x4, fixed_abs, tag = 'smem constant byte address 0x4 - core index']
  #allocation1 [shape = 'u32[144,128]{1,0:T(1,128)}', space=vmem, size = 0x12000, scoped, tag = 'internal scratch']
  %s0 = inlined_call_operand.vmem [shape: f32[8,256], index: 0, kind: input, shape index: {}]
  %s1 = inlined_call_operand.vmem [shape: f32[8,1], index: 1, kind: input, shape index: {}]
  %s2 = inlined_call_operand.vmem [shape: f32[8,1], index: 2, kind: input, shape index: {}]
  %s3 = inlined_call_operand.vmem [shape: f32[8,256], index: 3, kind: output, shape index: {}]
  %s4 = sld [smem:[#allocation0]]
  $region22: #{scaling_layer.1} parent=0
    _
  %s6 = ssub.s32 1, %s4
  %s7 = scalar_select 0, %s6, %s4
  // Predicated region
  $region2: #{scaling_layer.1} parent=0 // pred_check
    _
  $region3: #{scaling_layer.1} parent=0 // pred_check_branch
    %9 = sbr.rel (0) target = $region5
  $region4: #{scaling_layer.1} parent=0 // pred_region
    _
  $region5: #{scaling_layer.1} parent=0 // pred_fallthru
    _
  // Predicated region
  $region6: #{scaling_layer.1} parent=0 // pred_check
    _
  $region7: #{scaling_layer.1} parent=0 // pred_check_branch
    %11 = sbr.rel (0) target = $region9
  $region8: #{scaling_layer.1} parent=0 // pred_region
    _
  $region9: #{scaling_layer.1} parent=0 // pred_fallthru
    _
  // Predicated region
  $region10: #{scaling_layer.1} parent=0 // pred_check
    _
  $region11: #{scaling_layer.1} parent=0 // pred_check_branch
    %13 = sbr.rel (0) target = $region13
  $region12: #{scaling_layer.1} parent=0 // pred_region
    _
  $region13: #{scaling_layer.1} parent=0 // pred_fallthru
    _
  %v14 = vld [vmem:[%s0] sm:$0xff]
  %v15 = vld [vmem:[%s0 + $0x8] sm:$0xff]
  %v16 = vld [vmem:[%s1] sm:$0xff]
  %18 = vset.pattern.permute.xlu0 0
  %19 = vperm.xlu0 %18, %v16
  %v20 = vpop.permute.xlu0 %19
  %v22 = vsub.f32 %v14, %v20
  %v23 = vsub.f32 %v15, %v20
  %v24 = vld [vmem:[%s2] sm:$0xff]
  %26 = vset.pattern.permute.xlu0 0
  %27 = vperm.xlu0 %26, %v24
  %v28 = vpop.permute.xlu0 %27
  %v30 = vrcp.pop %v28
  %v31 = vmul.f32 %v22, %v30
  %v32 = vmul.f32 %v23, %v30
  %33 = vst [vmem:[%s3] sm:$0xff] %v31
  %34 = vst [vmem:[%s3 + $0x8] sm:$0xff] %v32
  // Predicated region
  $region14: #{scaling_layer.1} parent=0 // pred_check
    _
  $region15: #{scaling_layer.1} parent=0 // pred_check_branch
    %36 = sbr.rel (0) target = $region17
  $region16: #{scaling_layer.1} parent=0 // pred_region
    _
  $region17: #{scaling_layer.1} parent=0 // pred_fallthru
    _
  // Predicated region
  $region18: #{scaling_layer.1} parent=0 // pred_check
    _
  $region19: #{scaling_layer.1} parent=0 // pred_check_branch
    %38 = sbr.rel (0) target = $region21
  $region20: #{scaling_layer.1} parent=0 // pred_region
    _
  $region21: #{scaling_layer.1} parent=0 // pred_fallthru
    _

</llo_original>
